<compile_context>
chip_gen: v5e
topology: v5e:2x2
jax: 0.10.0
libtpu: 0.0.40
codegen_flags: <defaults>
</compile_context>

<pallas_src>
import functools

import jax
import jax.numpy as jnp
from jax.experimental import pallas as pl
from jax.experimental.pallas import tpu as pltpu


def _round_up(x, m):
    return ((x + m - 1) // m) * m


def _node_apply_kernel(h_ref, w_ref, b_ref, o_ref, acc_ref):
    """Partial (TM, TK) x (TK, F) matmul; bias+ReLU only on the last K step."""
    k = pl.program_id(1)

    @pl.when(k == 0)
    def _init():
        acc_ref[...] = jnp.zeros_like(acc_ref)

    acc_ref[...] += jnp.dot(
        h_ref[...], w_ref[...], preferred_element_type=jnp.float32)

    @pl.when(k == pl.num_programs(1) - 1)
    def _finalize():
        out = jnp.maximum(acc_ref[...] + b_ref[...], 0.0)
        o_ref[...] = out.astype(o_ref.dtype)


@functools.partial(jax.jit, static_argnames=("tm", "tk"))
def node_apply_module(h, w_t, b, *, tm=256, tk=512):
    """ReLU(h @ w_t + b).

    h:   [N, in_feats]         float32 node features (one row per node)
    w_t: [in_feats, out_feats] float32 (transposed nn.Linear weight)
    b:   [out_feats] or [1, out_feats] float32
    """
    n, k_in = h.shape
    k_in2, f_out = w_t.shape
    assert k_in == k_in2, "h / w_t inner dims must match"
    b = b.reshape(1, f_out)

    # MXU / lane-aligned padded sizes and tile sizes.
    tm_eff = min(tm, _round_up(n, 8))          # rows per tile (multiple of 8)
    n_pad = _round_up(n, tm_eff)
    k_pad = _round_up(k_in, 128)
    tk_eff = min(tk, k_pad)                    # reduction tile (multiple of 128)
    k_pad = _round_up(k_pad, tk_eff)
    f_pad = _round_up(f_out, 128)              # lane-dense output width

    h_p = jnp.pad(h, ((0, n_pad - n), (0, k_pad - k_in)))
    w_p = jnp.pad(w_t, ((0, k_pad - k_in), (0, f_pad - f_out)))
    b_p = jnp.pad(b, ((0, 0), (0, f_pad - f_out)))

    grid = (n_pad // tm_eff, k_pad // tk_eff)

    # Rough per-step VMEM need: double-buffered h/out, resident w/b, f32 acc.
    vmem_est = 4 * (2 * tm_eff * tk_eff        # h tiles (double-buffered)
                    + 2 * tm_eff * f_pad       # out tiles (double-buffered)
                    + 2 * tk_eff * f_pad       # weight
                    + 2 * 8 * f_pad            # bias
                    + tm_eff * f_pad)          # accumulator scratch
    vmem_limit = int(min(max(vmem_est + (4 << 20), 32 << 20), 100 << 20))

    out_p = pl.pallas_call(
        _node_apply_kernel,
        out_shape=jax.ShapeDtypeStruct((n_pad, f_pad), h.dtype),
        grid=grid,
        in_specs=[
            pl.BlockSpec((tm_eff, tk_eff), lambda i, kk: (i, kk)),   # h tile
            pl.BlockSpec((tk_eff, f_pad), lambda i, kk: (kk, 0)),    # weight
            pl.BlockSpec((1, f_pad), lambda i, kk: (0, 0)),          # bias
        ],
        out_specs=pl.BlockSpec((tm_eff, f_pad), lambda i, kk: (i, 0)),
        scratch_shapes=[pltpu.VMEM((tm_eff, f_pad), jnp.float32)],
        compiler_params=pltpu.CompilerParams(
            dimension_semantics=("parallel", "arbitrary"),
            vmem_limit_bytes=vmem_limit,
        ),
    )(h_p, w_p, b_p)

    return out_p[:n, :f_out]


def _reference(h, w_t, b):
    return jnp.maximum(h @ w_t + b.reshape(1, -1), 0.0)


if __name__ == "__main__":
    key = jax.random.PRNGKey(0)
    k_h, k_w, k_b = jax.random.split(key, 3)

    # Small, deliberately non-aligned shapes so the padding path is exercised.
    num_nodes, in_feats, out_feats = 200, 200, 72

    h = jax.random.normal(k_h, (num_nodes, in_feats), dtype=jnp.float32)
    w = jax.random.normal(k_w, (out_feats, in_feats), dtype=jnp.float32) * 0.1
    b = jax.random.normal(k_b, (out_feats,), dtype=jnp.float32) * 0.1

    w_t = w.T  # [in_feats, out_feats]

    # Small tiles here so the multi-tile grid (4 row tiles x 2 K tiles) and the
    # pl.when init/finalize paths are actually exercised at toy sizes; real
    # workloads should keep the larger defaults (tm=256, tk=512).
    out = node_apply_module(h, w_t, b, tm=64, tk=128)
    out = jax.block_until_ready(out)

    ref = _reference(h, w_t, b)
    assert out.shape == (num_nodes, out_feats)
    assert jnp.allclose(out, ref, atol=1e-4, rtol=1e-4), float(
        jnp.max(jnp.abs(out - ref)))

    print("KERNEL_OK")
</pallas_src>

<mosaic_0001>
module attributes {stable_mosaic.version = 11 : i64} {
  func.func @_node_apply_kernel(%arg0: i32, %arg1: i32, %arg2: memref<64x128xf32, #tpu.memory_space<vmem>>, %arg3: memref<128x128xf32, #tpu.memory_space<vmem>>, %arg4: memref<1x128xf32, #tpu.memory_space<vmem>>, %arg5: memref<64x128xf32, #tpu.memory_space<vmem>>, %arg6: memref<64x128xf32, #tpu.memory_space<vmem>>) attributes {dimension_semantics = [#tpu.dimension_semantics<parallel>, #tpu.dimension_semantics<arbitrary>], iteration_bounds = array<i64: 4, 2>, scalar_prefetch = 0 : i64, scratch_operands = 1 : i64, tpu.core_type = #tpu.core_type<tc>, window_params = [{transform_indices = @transform_0, window_bounds = array<i64: 64, 128>}, {transform_indices = @transform_1, window_bounds = array<i64: 128, 128>}, {pipeline_mode = #tpu.pipeline_mode<synchronous>, transform_indices = @transform_2, window_bounds = array<i64: 1, 128>}, {transform_indices = @transform_3, window_bounds = array<i64: 64, 128>}]} {
    %c0_i32 = arith.constant 0 : i32
    %0 = arith.cmpi eq, %arg1, %c0_i32 : i32
    %1 = arith.extui %0 : i1 to i32
    %c0_i32_0 = arith.constant 0 : i32
    %2 = arith.cmpi ne, %1, %c0_i32_0 : i32
    scf.if %2 {
      %cst_9 = arith.constant 0.000000e+00 : f32
      %12 = vector.broadcast %cst_9 : f32 to vector<64x128xf32>
      %c0_10 = arith.constant 0 : index
      %c0_11 = arith.constant 0 : index
      %13 = vector.load %arg6[%c0_10, %c0_11] : memref<64x128xf32, #tpu.memory_space<vmem>>, vector<64x128xf32>
      tpu.vector_store %arg6[%c0_10, %c0_11], %12 {strides = array<i32>} : memref<64x128xf32, #tpu.memory_space<vmem>>, vector<64x128xf32>,
    } else {
    }
    %c0 = arith.constant 0 : index
    %c0_1 = arith.constant 0 : index
    %3 = vector.load %arg6[%c0, %c0_1] : memref<64x128xf32, #tpu.memory_space<vmem>>, vector<64x128xf32>
    %c0_2 = arith.constant 0 : index
    %c0_3 = arith.constant 0 : index
    %4 = vector.load %arg2[%c0_2, %c0_3] : memref<64x128xf32, #tpu.memory_space<vmem>>, vector<64x128xf32>
    %c0_4 = arith.constant 0 : index
    %c0_5 = arith.constant 0 : index
    %5 = vector.load %arg3[%c0_4, %c0_5] : memref<128x128xf32, #tpu.memory_space<vmem>>, vector<128x128xf32>
    %cst = arith.constant dense<0.000000e+00> : vector<64x128xf32>
    %6 = tpu.matmul %4, %5, %cst {dimension_numbers = #tpu.dot_dimension_numbers<[1], [0], [0], [1], [0, 0, 1, 1], [], []>} : vector<64x128xf32>, vector<128x128xf32>, vector<64x128xf32> -> vector<64x128xf32>
    %7 = arith.addf %3, %6 : vector<64x128xf32>
    %c0_6 = arith.constant 0 : index
    %c0_7 = arith.constant 0 : index
    %8 = vector.load %arg6[%c0_6, %c0_7] : memref<64x128xf32, #tpu.memory_space<vmem>>, vector<64x128xf32>
    tpu.vector_store %arg6[%c0_6, %c0_7], %7 {strides = array<i32>} : memref<64x128xf32, #tpu.memory_space<vmem>>, vector<64x128xf32>,
    %c1_i32 = arith.constant 1 : i32
    %9 = arith.cmpi eq, %arg1, %c1_i32 : i32
    %10 = arith.extui %9 : i1 to i32
    %c0_i32_8 = arith.constant 0 : i32
    %11 = arith.cmpi ne, %10, %c0_i32_8 : i32
    scf.if %11 {
      %c0_9 = arith.constant 0 : index
      %c0_10 = arith.constant 0 : index
      %12 = vector.load %arg6[%c0_9, %c0_10] : memref<64x128xf32, #tpu.memory_space<vmem>>, vector<64x128xf32>
      %c0_11 = arith.constant 0 : index
      %c0_12 = arith.constant 0 : index
      %13 = vector.load %arg4[%c0_11, %c0_12] : memref<1x128xf32, #tpu.memory_space<vmem>>, vector<1x128xf32>
      %14 = vector.broadcast %13 : vector<1x128xf32> to vector<64x128xf32>
      %15 = arith.addf %12, %14 : vector<64x128xf32>
      %cst_13 = arith.constant 0.000000e+00 : f32
      %16 = vector.broadcast %cst_13 : f32 to vector<64x128xf32>
      %17 = arith.maximumf %15, %16 : vector<64x128xf32>
      %c0_14 = arith.constant 0 : index
      %c0_15 = arith.constant 0 : index
      %18 = vector.load %arg5[%c0_14, %c0_15] : memref<64x128xf32, #tpu.memory_space<vmem>>, vector<64x128xf32>
      tpu.vector_store %arg5[%c0_14, %c0_15], %17 {strides = array<i32>} : memref<64x128xf32, #tpu.memory_space<vmem>>, vector<64x128xf32>,
    } else {
    }
    return
  }
  func.func @transform_0(%arg0: i32, %arg1: i32) -> (i32, i32) {
    %c0_i32 = arith.constant 0 : i32
    return %arg0, %arg1 : i32, i32
  }
  func.func @transform_1(%arg0: i32, %arg1: i32) -> (i32, i32) {
    %c0_i32 = arith.constant 0 : i32
    %c0_i32_0 = arith.constant 0 : i32
    return %arg1, %c0_i32 : i32, i32
  }
  func.func @transform_2(%arg0: i32, %arg1: i32) -> (i32, i32) {
    %c0_i32 = arith.constant 0 : i32
    %c0_i32_0 = arith.constant 0 : i32
    %c0_i32_1 = arith.constant 0 : i32
    return %c0_i32, %c0_i32_0 : i32, i32
  }
  func.func @transform_3(%arg0: i32, %arg1: i32) -> (i32, i32) {
    %c0_i32 = arith.constant 0 : i32
    %c0_i32_0 = arith.constant 0 : i32
    return %arg0, %c0_i32 : i32, i32
  }
}

</mosaic_0001>

<llo_original>
// kernel: node_apply_module.1
$region0: #{node_apply_module.1}
  #allocation0 [shape = 'u32[]', space=smem, size = 0x4, offset = 0x4, fixed_abs, tag = 'smem constant byte address 0x4 - core index']
  #allocation1 [shape = 'u32[72,128]{1,0:T(1,128)}', space=vmem, size = 0x9000, scoped, tag = 'internal scratch']
  #allocation2 [shape = 'f32[64,128]{1,0:T(8,128)}', space=vmem, size = 0x8000, scoped, tag = 'scratch operand']
  %s0 = inlined_call_operand.vmem [shape: f32[256,256], index: 0, kind: input, shape index: {}]
  %s1 = inlined_call_operand.vmem [shape: f32[256,128], index: 1, kind: input, shape index: {}]
  %s2 = inlined_call_operand.vmem [shape: f32[1,128], index: 2, kind: input, shape index: {}]
  %s3 = inlined_call_operand.vmem [shape: f32[256,128], index: 3, kind: output, shape index: {}]
  %s4 = sld [smem:[#allocation0]]
  $region91: #{node_apply_module.1} parent=0
    _
  %s6 = ssub.s32 1, %s4
  %s7 = scalar_select 0, %s6, %s4
  $region1: #{node_apply_module.1} parent=0
    #allocation3 [shape = 'u8[65536]{0}', space=vmem, size = 0x10000, scoped, tag = 'input window, operand 0']
    loop: start=0, step=1, limit=10
    $region2: #{node_apply_module.1} parent=1 // loop_pre_header
      _
    $region3: #{node_apply_module.1} parent=1 // loop_header
      %s9 = sphi 0, %s13
      %p10 = scmp.ge.s32.totalorder %s9, 10
      %s16 = sphi 0, %s28
      %s17 = sphi 0, %s24
      %s18 = sphi 0, %s16
      %s19 = sphi 0, %s17
      %s20 = sphi 0, %s18
      %s21 = sphi 0, %s19
      %s33 = sphi 0, %s35
      %s36 = sphi 0, %s33
      %s37 = sphi 0, %s36
      %s53 = sphi 0, %s37
      %s59 = sphi 0, %s61
      %s62 = sphi 0, %s59
      %s63 = sphi 0, %s62
      %s79 = sphi 0, %s63
      %s83 = sphi 0, %s83
      %s85 = sphi 0, %s83
      %s86 = sphi 0, %s85
      %s100 = sphi 0, %s86
      %s106 = sphi 0, %s108
      %s109 = sphi 0, %s106
      %s110 = sphi 0, %s109
      %s126 = sphi 0, %s110
    $region4: #{node_apply_module.1} parent=1 // loop_header_branch
      %12 = sbr.rel (%p10) target = $region8
    $region5: #{node_apply_module.1} parent=1 // loop_body
      %s14 = ssub.s32 %s9, 1
      %s15 = ssub.s32 %s9, 2
      %s22 = sadd.s32 1, %s17
      %p23 = scmp.ge.s32.totalorder %s22, 2
      %s24 = scalar_select %p23, 0, %s22
      %s25 = sadd.s32 1, %s16
      %s26 = scalar_select %p23, %s25, %s16
      %p27 = scmp.ge.s32.totalorder %s26, 4
      %s28 = scalar_select %p27, 0, %s26
      %s29 = ssub.s32 %s16, %s28
      %s30 = ssub.s32 %s17, %s24
      %s31 = sor.u32 %s29, %s30
      %p32 = scmp.eq.s32.totalorder %s31, 0
      %s34 = sadd.s32 %s33, 1
      %s35 = scalar_select %p32, %s33, %s34
      %p38 = pneg %p32
      %p39 = scmp.eq.s32.totalorder %s9, 7
      %p40 = por %p38, %p39
      %p41 = scmp.ne.s32.totalorder %s33, %s36
      %p42 = scmp.eq.s32.totalorder %s9, 0
      %p43 = por %p41, %p42
      %p44 = scmp.ne.s32.totalorder %s33, %s36
      %p45 = scmp.eq.s32.totalorder %s14, 7
      %p46 = por %p44, %p45
      %p47 = scmp.ne.s32.totalorder %s36, %s37
      %p48 = scmp.eq.s32.totalorder %s14, 0
      %p49 = por %p47, %p48
      %p50 = scmp.ne.s32.totalorder %s36, %s37
      %p51 = scmp.eq.s32.totalorder %s15, 7
      %p52 = por %p50, %p51
      %p54 = scmp.ne.s32.totalorder %s37, %s53
      %p55 = scmp.eq.s32.totalorder %s15, 0
      %p56 = por %p54, %p55
      %s57 = ssub.s32 %s17, %s24
      %p58 = scmp.eq.s32.totalorder %s57, 0
      %s60 = sadd.s32 %s59, 1
      %s61 = scalar_select %p58, %s59, %s60
      %p64 = pneg %p58
      %p65 = scmp.eq.s32.totalorder %s9, 7
      %p66 = por %p64, %p65
      %p67 = scmp.ne.s32.totalorder %s59, %s62
      %p68 = scmp.eq.s32.totalorder %s9, 0
      %p69 = por %p67, %p68
      %p70 = scmp.ne.s32.totalorder %s59, %s62
      %p71 = scmp.eq.s32.totalorder %s14, 7
      %p72 = por %p70, %p71
      %p73 = scmp.ne.s32.totalorder %s62, %s63
      %p74 = scmp.eq.s32.totalorder %s14, 0
      %p75 = por %p73, %p74
      %p76 = scmp.ne.s32.totalorder %s62, %s63
      %p77 = scmp.eq.s32.totalorder %s15, 7
      %p78 = por %p76, %p77
      %p80 = scmp.ne.s32.totalorder %s63, %s79
      %p81 = scmp.eq.s32.totalorder %s15, 0
      %p82 = por %p80, %p81
      %s84 = sadd.s32 %s83, 1
      %p87 = scmp.eq.s32.totalorder %s9, 7
      %p88 = scmp.ne.s32.totalorder %s83, %s85
      %p89 = scmp.eq.s32.totalorder %s9, 0
      %p90 = por %p88, %p89
      %p91 = scmp.ne.s32.totalorder %s83, %s85
      %p92 = scmp.eq.s32.totalorder %s14, 7
      %p93 = por %p91, %p92
      %p94 = scmp.ne.s32.totalorder %s85, %s86
      %p95 = scmp.eq.s32.totalorder %s14, 0
      %p96 = por %p94, %p95
      %p97 = scmp.ne.s32.totalorder %s85, %s86
      %p98 = scmp.eq.s32.totalorder %s15, 7
      %p99 = por %p97, %p98
      %p101 = scmp.ne.s32.totalorder %s86, %s100
      %p102 = scmp.eq.s32.totalorder %s15, 0
      %p103 = por %p101, %p102
      %s104 = ssub.s32 %s16, %s28
      %p105 = scmp.eq.s32.totalorder %s104, 0
      %s107 = sadd.s32 %s106, 1
      %s108 = scalar_select %p105, %s106, %s107
      %p111 = pneg %p105
      %p112 = scmp.eq.s32.totalorder %s9, 7
      %p113 = por %p111, %p112
      %p114 = scmp.ne.s32.totalorder %s106, %s109
      %p115 = scmp.eq.s32.totalorder %s9, 0
      %p116 = por %p114, %p115
      %p117 = scmp.ne.s32.totalorder %s106, %s109
      %p118 = scmp.eq.s32.totalorder %s14, 7
      %p119 = por %p117, %p118
      %p120 = scmp.ne.s32.totalorder %s109, %s110
      %p121 = scmp.eq.s32.totalorder %s14, 0
      %p122 = por %p120, %p121
      %p123 = scmp.ne.s32.totalorder %s109, %s110
      %p124 = scmp.eq.s32.totalorder %s15, 7
      %p125 = por %p123, %p124
      %p127 = scmp.ne.s32.totalorder %s110, %s126
      %p128 = scmp.eq.s32.totalorder %s15, 0
      %p129 = por %p127, %p128
      %p130 = scmp.le.s32.totalorder 1, %s9
      %p131 = scmp.lt.s32.totalorder %s9, 9
      %p132 = pnand %p130, %p131
      %p133 = pneg %p132
      // Predicated region
      $region9: #{node_apply_module.1} parent=5 // pred_check
        _
      $region10: #{node_apply_module.1} parent=5 // pred_check_branch
        %135 = sbr.rel (%p132) target = $region12
      $region11: #{node_apply_module.1} parent=5 // pred_region
        %s136 = ssub.s32 %s9, 1
        // Predicated region
        $region13: #{node_apply_module.1} parent=11 // pred_check
          %p137 = pneg %p96
        $region14: #{node_apply_module.1} parent=11 // pred_check_branch
          %139 = sbr.rel (%p137) target = $region16
        $region15: #{node_apply_module.1} parent=11 // pred_region
          _
        $region16: #{node_apply_module.1} parent=11 // pred_fallthru
          _
      $region12: #{node_apply_module.1} parent=5 // pred_fallthru
        _
      %p140 = scmp.lt.s32.totalorder %s9, 8
      // Predicated region
      $region17: #{node_apply_module.1} parent=5 // pred_check
        %p141 = pneg %p140
      $region18: #{node_apply_module.1} parent=5 // pred_check_branch
        %143 = sbr.rel (%p141) target = $region20
      $region19: #{node_apply_module.1} parent=5 // pred_region
        // Predicated region
        $region21: #{node_apply_module.1} parent=19 // pred_check
          %p144 = pneg %p43
        $region22: #{node_apply_module.1} parent=19 // pred_check_branch
          %146 = sbr.rel (%p144) target = $region24
        $region23: #{node_apply_module.1} parent=19 // pred_region
          %s147 = sand.u32 %s33, 1
          %s148 = sand.u32 %s33, 1
          %s149 = smul.addr %s148, 64
          %s150 = scalar_lea.vmem [#allocation3], %s149
          %s151 = smul.u32 8, %s16
          %s152 = smul.addr %s151, 2
          %s153 = sadd.s32 %s17, %s152
          %s154 = smul.addr %s153, 8
          %s155 = scalar_lea.vmem %s0, %s154
          // Predicated region
          $region25: #{node_apply_module.1} parent=23 // pred_check
            _
          $region26: #{node_apply_module.1} parent=23 // pred_check_branch
            %157 = sbr.rel (0) target = $region28
          $region27: #{node_apply_module.1} parent=23 // pred_region
            // Predicated region
            $region29: #{node_apply_module.1} parent=27 // pred_check
              _
            $region30: #{node_apply_module.1} parent=27 // pred_check_branch
              %159 = sbr.rel (0) target = $region32
            $region31: #{node_apply_module.1} parent=27 // pred_region
              // Predicated region
              $region44: #{node_apply_module.1} parent=31 // pred_check
                _
              $region45: #{node_apply_module.1} parent=31 // pred_check_branch
                %189 = sbr.rel (0) target = $region47
              $region46: #{node_apply_module.1} parent=31 // pred_region
                loop: start=0, step=1, limit=1
                $region48: #{node_apply_module.1} parent=46 // loop_pre_header
                  _
                $region49: #{node_apply_module.1} parent=46 // loop_header
                  %s191 = sphi 0, %s195
                  %p192 = scmp.ge.s32.totalorder %s191, 1
                  %s196 = sphi %s155, %s155
                  %s197 = sphi %s150, %s150
                $region50: #{node_apply_module.1} parent=46 // loop_header_branch
                  %194 = sbr.rel (%p192) target = $region54
                $region51: #{node_apply_module.1} parent=46 // loop_body
                  %v198 = vld [vmem:[%s196] sm:$0xff]
                  %199 = vst [vmem:[%s197] sm:$0xff] %v198
                  %v200 = vld [vmem:[%s196 + $0x10] sm:$0xff]
                  %201 = vst [vmem:[%s197 + $0x8] sm:$0xff] %v200
                  %v202 = vld [vmem:[%s196 + $0x20] sm:$0xff]
                  %203 = vst [vmem:[%s197 + $0x10] sm:$0xff] %v202
                  %v204 = vld [vmem:[%s196 + $0x30] sm:$0xff]
                  %205 = vst [vmem:[%s197 + $0x18] sm:$0xff] %v204
                  %v206 = vld [vmem:[%s196 + $0x40] sm:$0xff]
                  %207 = vst [vmem:[%s197 + $0x20] sm:$0xff] %v206
                  %v208 = vld [vmem:[%s196 + $0x50] sm:$0xff]
                  %209 = vst [vmem:[%s197 + $0x28] sm:$0xff] %v208
                  %v210 = vld [vmem:[%s196 + $0x60] sm:$0xff]
                  %211 = vst [vmem:[%s197 + $0x30] sm:$0xff] %v210
                  %v212 = vld [vmem:[%s196 + $0x70] sm:$0xff]
                  %213 = vst [vmem:[%s197 + $0x38] sm:$0xff] %v212
                $region52: #{node_apply_module.1} parent=46 // loop_footer
                  %s195 = sadd.s32 1, %s191
                $region53: #{node_apply_module.1} parent=46 // loop_footer_branch
                  %190 = sbr.rel target = $region49
                $region54: #{node_apply_module.1} parent=46 // loop_exit
                  _
              $region47: #{node_apply_module.1} parent=31 // pred_fallthru
                _
              // Predicated region
              $region55: #{node_apply_module.1} parent=31 // pred_check
                _
              $region56: #{node_apply_module.1} parent=31 // pred_check_branch
                %215 = sbr.rel target = $region58
              $region57: #{node_apply_module.1} parent=31 // pred_region
                _
              $region58: #{node_apply_module.1} parent=31 // pred_fallthru
                _
            $region32: #{node_apply_module.1} parent=27 // pred_fallthru
              _
            // Predicated region
            $region33: #{node_apply_module.1} parent=27 // pred_check
              _
            $region34: #{node_apply_module.1} parent=27 // pred_check_branch
              %161 = sbr.rel target = $region36
            $region35: #{node_apply_module.1} parent=27 // pred_region
              %s163 = ssub.s32 256, 1
              loop: start=0, step=1, limit=1
              $region37: #{node_apply_module.1} parent=35 // loop_pre_header
                _
              $region38: #{node_apply_module.1} parent=35 // loop_header
                %s165 = sphi 0, %s169
                %p166 = scmp.ge.s32.totalorder %s165, 1
                %s170 = sphi %s155, %s155
                %s171 = sphi %s150, %s150
              $region39: #{node_apply_module.1} parent=35 // loop_header_branch
                %168 = sbr.rel (%p166) target = $region43
              $region40: #{node_apply_module.1} parent=35 // loop_body
                %v172 = vld [vmem:[%s170] sm:%s163]
                %173 = vst [vmem:[%s171] sm:%s163] %v172
                %v174 = vld [vmem:[%s170 + $0x10] sm:%s163]
                %175 = vst [vmem:[%s171 + $0x8] sm:%s163] %v174
                %v176 = vld [vmem:[%s170 + $0x20] sm:%s163]
                %177 = vst [vmem:[%s171 + $0x10] sm:%s163] %v176
                %v178 = vld [vmem:[%s170 + $0x30] sm:%s163]
                %179 = vst [vmem:[%s171 + $0x18] sm:%s163] %v178
                %v180 = vld [vmem:[%s170 + $0x40] sm:%s163]
                %181 = vst [vmem:[%s171 + $0x20] sm:%s163] %v180
                %v182 = vld [vmem:[%s170 + $0x50] sm:%s163]
                %183 = vst [vmem:[%s171 + $0x28] sm:%s163] %v182
                %v184 = vld [vmem:[%s170 + $0x60] sm:%s163]
                %185 = vst [vmem:[%s171 + $0x30] sm:%s163] %v184
                %v186 = vld [vmem:[%s170 + $0x70] sm:%s163]
                %187 = vst [vmem:[%s171 + $0x38] sm:%s163] %v186
              $region41: #{node_apply_module.1} parent=35 // loop_footer
                %s169 = sadd.s32 1, %s165
              $region42: #{node_apply_module.1} parent=35 // loop_footer_branch
                %164 = sbr.rel target = $region38
              $region43: #{node_apply_module.1} parent=35 // loop_exit
                _
            $region36: #{node_apply_module.1} parent=27 // pred_fallthru
              _
          $region28: #{node_apply_module.1} parent=23 // pred_fallthru
            _
          %216 = vnop
        $region24: #{node_apply_module.1} parent=19 // pred_fallthru
          _
        // Predicated region
        $region59: #{node_apply_module.1} parent=19 // pred_check
          %p217 = pneg %p69
        $region60: #{node_apply_module.1} parent=19 // pred_check_branch
          %219 = sbr.rel (%p217) target = $region62
        $region61: #{node_apply_module.1} parent=19 // pred_region
          %s220 = smul.u32 16, %s17
          %p221 = scmp.lt.s32.totalorder %s220, 31
          %s222 = scalar_select %p221, %s220, 31
          %s223 = smul.addr %s222, 8
          %s224 = scalar_lea.vmem %s1, %s223
          %s225 = smul.u32 16, %s17
        $region62: #{node_apply_module.1} parent=19 // pred_fallthru
          _
      $region20: #{node_apply_module.1} parent=5 // pred_fallthru
        _
      %p226 = scmp.le.s32.totalorder 1, %s9
      %p227 = scmp.lt.s32.totalorder %s9, 9
      %p228 = pnand %p226, %p227
      %p229 = pneg %p228
      // Predicated region
      $region63: #{node_apply_module.1} parent=5 // pred_check
        _
      $region64: #{node_apply_module.1} parent=5 // pred_check_branch
        %231 = sbr.rel (%p228) target = $region66
      $region65: #{node_apply_module.1} parent=5 // pred_region
        %s232 = ssub.s32 %s9, 1
        %s233 = sand.u32 %s36, 1
        %s234 = sand.u32 %s36, 1
        %s235 = smul.addr %s234, 64
        %s236 = scalar_lea.vmem [#allocation3], %s235
        // Predicated region
        $region67: #{node_apply_module.1} parent=65 // pred_check
          %p237 = pneg %p49
        $region68: #{node_apply_module.1} parent=65 // pred_check_branch
          %239 = sbr.rel (%p237) target = $region70
        $region69: #{node_apply_module.1} parent=65 // pred_region
          _
        $region70: #{node_apply_module.1} parent=65 // pred_fallthru
          _
        %s240 = sand.u32 %s36, 1
        %s241 = sand.u32 %s36, 1
        %s242 = smul.addr %s241, 64
        %s243 = scalar_lea.vmem [#allocation3], %s242
        %p244 = pneg %p49
        %p245 = pneg %p46
        %s246 = smul.u32 16, %s19
        %p247 = scmp.lt.s32.totalorder %s246, 31
        %s248 = scalar_select %p247, %s246, 31
        %s249 = smul.addr %s248, 8
        %s250 = scalar_lea.vmem %s1, %s249
        %p251 = pneg %p75
        %p252 = pneg %p72
        %p253 = pneg %p96
        %p254 = pneg %p93
        %p255 = pneg %p122
        %p256 = pneg %p119
        %s257 = smul.u32 8, %s18
        %p258 = scmp.lt.s32.totalorder %s257, 31
        %s259 = scalar_select %p258, %s257, 31
        %s260 = smul.addr %s259, 8
        %s261 = scalar_lea.vmem %s3, %s260
        %s262 = smul.u32 8, %s18
        %s263 = smul.u32 16, %s19
        %p264 = scmp.lt.s32.totalorder %s263, 31
        %s265 = scalar_select %p264, %s263, 31
        %s266 = smul.addr %s265, 8
        %s267 = scalar_lea.vmem %s1, %s266
        %s268 = smul.u32 16, %s19
        %s269 = smul.u32 8, %s18
        %p270 = scmp.lt.s32.totalorder %s269, 31
        %s271 = scalar_select %p270, %s269, 31
        %s272 = smul.addr %s271, 8
        %s273 = scalar_lea.vmem %s3, %s272
        %s274 = smul.u32 8, %s18
        %p275 = scmp.eq.s32.totalorder %s19, 0
        // Predicated region
        $region71: #{node_apply_module.1} parent=65 // pred_check
          %p276 = pneg %p275
        $region72: #{node_apply_module.1} parent=65 // pred_check_branch
          %278 = sbr.rel (%p276) target = $region74
        $region73: #{node_apply_module.1} parent=65 // pred_region
          %279 = vst [vmem:[#allocation2] sm:$0xff] 0.0
          %280 = vst [vmem:[#allocation2 + $0x8] sm:$0xff] 0.0
          %281 = vst [vmem:[#allocation2 + $0x10] sm:$0xff] 0.0
          %282 = vst [vmem:[#allocation2 + $0x18] sm:$0xff] 0.0
          %283 = vst [vmem:[#allocation2 + $0x20] sm:$0xff] 0.0
          %284 = vst [vmem:[#allocation2 + $0x28] sm:$0xff] 0.0
          %285 = vst [vmem:[#allocation2 + $0x30] sm:$0xff] 0.0
          %286 = vst [vmem:[#allocation2 + $0x38] sm:$0xff] 0.0
        $region74: #{node_apply_module.1} parent=65 // pred_fallthru
          _
        %v287 = vld [vmem:[#allocation2] sm:$0xff]
        %v288 = vld [vmem:[#allocation2 + $0x8] sm:$0xff]
        %v289 = vld [vmem:[#allocation2 + $0x10] sm:$0xff]
        %v290 = vld [vmem:[#allocation2 + $0x18] sm:$0xff]
        %v291 = vld [vmem:[#allocation2 + $0x20] sm:$0xff]
        %v292 = vld [vmem:[#allocation2 + $0x28] sm:$0xff]
        %v293 = vld [vmem:[#allocation2 + $0x30] sm:$0xff]
        %v294 = vld [vmem:[#allocation2 + $0x38] sm:$0xff]
        %v295 = vld [vmem:[%s236] sm:$0xff]
        %v296 = vld [vmem:[%s236 + $0x8] sm:$0xff]
        %v297 = vld [vmem:[%s236 + $0x10] sm:$0xff]
        %v298 = vld [vmem:[%s236 + $0x18] sm:$0xff]
        %v299 = vld [vmem:[%s236 + $0x20] sm:$0xff]
        %v300 = vld [vmem:[%s236 + $0x28] sm:$0xff]
        %v301 = vld [vmem:[%s236 + $0x30] sm:$0xff]
        %v302 = vld [vmem:[%s236 + $0x38] sm:$0xff]
        %v303 = vld [vmem:[%s267] sm:$0xff]
        %v304 = vld [vmem:[%s267 + $0x8] sm:$0xff]
        %v305 = vld [vmem:[%s267 + $0x10] sm:$0xff]
        %v306 = vld [vmem:[%s267 + $0x18] sm:$0xff]
        %v307 = vld [vmem:[%s267 + $0x20] sm:$0xff]
        %v308 = vld [vmem:[%s267 + $0x28] sm:$0xff]
        %v309 = vld [vmem:[%s267 + $0x30] sm:$0xff]
        %v310 = vld [vmem:[%s267 + $0x38] sm:$0xff]
        %v311 = vld [vmem:[%s267 + $0x40] sm:$0xff]
        %v312 = vld [vmem:[%s267 + $0x48] sm:$0xff]
        %v313 = vld [vmem:[%s267 + $0x50] sm:$0xff]
        %v314 = vld [vmem:[%s267 + $0x58] sm:$0xff]
        %v315 = vld [vmem:[%s267 + $0x60] sm:$0xff]
        %v316 = vld [vmem:[%s267 + $0x68] sm:$0xff]
        %v317 = vld [vmem:[%s267 + $0x70] sm:$0xff]
        %v318 = vld [vmem:[%s267 + $0x78] sm:$0xff]
        %319 = vmatpush.msra.mxu0 %v318
        %320 = vmatpush.msra.mxu0 %v317
        %321 = vmatpush.msra.mxu0 %v316
        %322 = vmatpush.msra.mxu0 %v315
        %323 = vmatpush.msra.mxu0 %v314
        %324 = vmatpush.msra.mxu0 %v313
        %325 = vmatpush.msra.mxu0 %v312
        %326 = vmatpush.msra.mxu0 %v311
        %327 = vmatpush.msra.mxu0 %v310
        %328 = vmatpush.msra.mxu0 %v309
        %329 = vmatpush.msra.mxu0 %v308
        %330 = vmatpush.msra.mxu0 %v307
        %331 = vmatpush.msra.mxu0 %v306
        %332 = vmatpush.msra.mxu0 %v305
        %333 = vmatpush.msra.mxu0 %v304
        %334 = vmatpush.msra.mxu0 %v303
        %335 = vmatmul.f32.gmra.mxu0 %v295
        %v336 = vpop.f32.mrf.mxu0
        %v337 = vadd.f32 0.0, %v336
        %338 = vmatmul.f32.gmra.mxu0 %v296
        %v339 = vpop.f32.mrf.mxu0
        %v340 = vadd.f32 0.0, %v339
        %341 = vmatmul.f32.gmra.mxu0 %v297
        %v342 = vpop.f32.mrf.mxu0
        %v343 = vadd.f32 0.0, %v342
        %344 = vmatmul.f32.gmra.mxu0 %v298
        %v345 = vpop.f32.mrf.mxu0
        %v346 = vadd.f32 0.0, %v345
        %347 = vmatmul.f32.gmra.mxu0 %v299
        %v348 = vpop.f32.mrf.mxu0
        %v349 = vadd.f32 0.0, %v348
        %350 = vmatmul.f32.gmra.mxu0 %v300
        %v351 = vpop.f32.mrf.mxu0
        %v352 = vadd.f32 0.0, %v351
        %353 = vmatmul.f32.gmra.mxu0 %v301
        %v354 = vpop.f32.mrf.mxu0
        %v355 = vadd.f32 0.0, %v354
        %356 = vmatmul.f32.gmra.mxu0 %v302
        %v357 = vpop.f32.mrf.mxu0
        %v358 = vadd.f32 0.0, %v357
        %359 = vdwg.mxu0
        %v360 = vadd.f32 %v287, %v337
        %v361 = vadd.f32 %v288, %v340
        %v362 = vadd.f32 %v289, %v343
        %v363 = vadd.f32 %v290, %v346
        %v364 = vadd.f32 %v291, %v349
        %v365 = vadd.f32 %v292, %v352
        %v366 = vadd.f32 %v293, %v355
        %v367 = vadd.f32 %v294, %v358
        %368 = vst [vmem:[#allocation2] sm:$0xff] %v360
        %369 = vst [vmem:[#allocation2 + $0x8] sm:$0xff] %v361
        %370 = vst [vmem:[#allocation2 + $0x10] sm:$0xff] %v362
        %371 = vst [vmem:[#allocation2 + $0x18] sm:$0xff] %v363
        %372 = vst [vmem:[#allocation2 + $0x20] sm:$0xff] %v364
        %373 = vst [vmem:[#allocation2 + $0x28] sm:$0xff] %v365
        %374 = vst [vmem:[#allocation2 + $0x30] sm:$0xff] %v366
        %375 = vst [vmem:[#allocation2 + $0x38] sm:$0xff] %v367
        %p376 = scmp.eq.s32.totalorder %s19, 1
        // Predicated region
        $region75: #{node_apply_module.1} parent=65 // pred_check
          %p377 = pneg %p376
        $region76: #{node_apply_module.1} parent=65 // pred_check_branch
          %379 = sbr.rel (%p377) target = $region78
        $region77: #{node_apply_module.1} parent=65 // pred_region
          %v380 = vld [vmem:[#allocation2] sm:$0xff]
          %v381 = vld [vmem:[#allocation2 + $0x8] sm:$0xff]
          %v382 = vld [vmem:[#allocation2 + $0x10] sm:$0xff]
          %v383 = vld [vmem:[#allocation2 + $0x18] sm:$0xff]
          %v384 = vld [vmem:[#allocation2 + $0x20] sm:$0xff]
          %v385 = vld [vmem:[#allocation2 + $0x28] sm:$0xff]
          %v386 = vld [vmem:[#allocation2 + $0x30] sm:$0xff]
          %v387 = vld [vmem:[#allocation2 + $0x38] sm:$0xff]
          %v388 = vld [vmem:[%s2] sm:$0x1]
          %v390 = vperm.slane %v388, 0
          %v392 = vadd.f32 %v380, %v390
          %v393 = vadd.f32 %v381, %v390
          %v394 = vadd.f32 %v382, %v390
          %v395 = vadd.f32 %v383, %v390
          %v396 = vadd.f32 %v384, %v390
          %v397 = vadd.f32 %v385, %v390
          %v398 = vadd.f32 %v386, %v390
          %v399 = vadd.f32 %v387, %v390
          %v400 = vmax.f32 %v392, 0.0
          %v401 = vmax.f32 %v393, 0.0
          %v402 = vmax.f32 %v394, 0.0
          %v403 = vmax.f32 %v395, 0.0
          %v404 = vmax.f32 %v396, 0.0
          %v405 = vmax.f32 %v397, 0.0
          %v406 = vmax.f32 %v398, 0.0
          %v407 = vmax.f32 %v399, 0.0
          %408 = vst [vmem:[%s273] sm:$0xff] %v400
          %409 = vst [vmem:[%s273 + $0x8] sm:$0xff] %v401
          %410 = vst [vmem:[%s273 + $0x10] sm:$0xff] %v402
          %411 = vst [vmem:[%s273 + $0x18] sm:$0xff] %v403
          %412 = vst [vmem:[%s273 + $0x20] sm:$0xff] %v404
          %413 = vst [vmem:[%s273 + $0x28] sm:$0xff] %v405
          %414 = vst [vmem:[%s273 + $0x30] sm:$0xff] %v406
          %415 = vst [vmem:[%s273 + $0x38] sm:$0xff] %v407
        $region78: #{node_apply_module.1} parent=65 // pred_fallthru
          _
        %s416 = smul.u32 8, %s18
        %p417 = scmp.lt.s32.totalorder %s416, 31
        %s418 = scalar_select %p417, %s416, 31
        %s419 = smul.addr %s418, 8
        %s420 = scalar_lea.vmem %s3, %s419
        // Predicated region
        $region79: #{node_apply_module.1} parent=65 // pred_check
          %p421 = pneg %p119
        $region80: #{node_apply_module.1} parent=65 // pred_check_branch
          %423 = sbr.rel (%p421) target = $region82
        $region81: #{node_apply_module.1} parent=65 // pred_region
          %s424 = smul.u32 8, %s18
        $region82: #{node_apply_module.1} parent=65 // pred_fallthru
          _
      $region66: #{node_apply_module.1} parent=5 // pred_fallthru
        _
      %p425 = scmp.le.s32.totalorder 2, %s9
      // Predicated region
      $region83: #{node_apply_module.1} parent=5 // pred_check
        %p426 = pneg %p425
      $region84: #{node_apply_module.1} parent=5 // pred_check_branch
        %428 = sbr.rel (%p426) target = $region86
      $region85: #{node_apply_module.1} parent=5 // pred_region
        %s429 = ssub.s32 %s9, 2
        // Predicated region
        $region87: #{node_apply_module.1} parent=85 // pred_check
          %p430 = pneg %p125
        $region88: #{node_apply_module.1} parent=85 // pred_check_branch
          %432 = sbr.rel (%p430) target = $region90
        $region89: #{node_apply_module.1} parent=85 // pred_region
          %s433 = smul.u32 8, %s20
          %p434 = scmp.lt.s32.totalorder %s433, 31
          %s435 = scalar_select %p434, %s433, 31
          %s436 = smul.addr %s435, 8
          %s437 = scalar_lea.vmem %s3, %s436
        $region90: #{node_apply_module.1} parent=85 // pred_fallthru
          _
      $region86: #{node_apply_module.1} parent=5 // pred_fallthru
        _
    $region6: #{node_apply_module.1} parent=1 // loop_footer
      %s13 = sadd.s32 1, %s9
    $region7: #{node_apply_module.1} parent=1 // loop_footer_branch
      %8 = sbr.rel target = $region3
    $region8: #{node_apply_module.1} parent=1 // loop_exit
      _

</llo_original>
